<compile_context>
chip_gen: v5e
topology: v5e:2x2
jax: 0.10.0
libtpu: 0.0.40
codegen_flags: <defaults>
</compile_context>

<pallas_src>
import functools
import math

import jax
import jax.numpy as jnp
import numpy as np
from jax import lax
from jax.experimental import pallas as pl
from jax.experimental.pallas import tpu as pltpu


def _softmax(x, axis, use_bf16_exp):
    m = jnp.max(x, axis=axis, keepdims=True)
    z = x - m
    if use_bf16_exp:
        # v6e/v7x EUP has a bf16 path (~2x transcendental throughput); the
        # sum / normalization stays in f32.
        e = jnp.exp(z.astype(jnp.bfloat16)).astype(jnp.float32)
    else:
        # v5e: no bf16 VPU/EUP path -- keep the exp in f32.
        e = jnp.exp(z)
    # EUP approximate reciprocal instead of a VALU divide.
    return e * pl.reciprocal(jnp.sum(e, axis=axis, keepdims=True), approx=True)


def cq_attention_kernel(c_ref, q_ref, qt_ref, cmask_ref, qmask_ref,
                        w4c_ref, w4q_ref, w4mlu_ref, bias_ref, out_ref,
                        *, use_bf16_exp):
    Dp = c_ref.shape[1]     # padded channel count (block shape), NOT the raw D

    c = c_ref[0]            # (Dp, Lcp)  channel-first, native dtype
    q = q_ref[0]            # (Dp, Lkp)  channel-first
    qt = qt_ref[0]          # (Lkp, Dp)  seq-major copy of Q (small)
    cmask = cmask_ref[0]    # (1, Lcp)
    qmask = qmask_ref[0]    # (Lkp, 1)
    w4c = w4c_ref[...]      # (Dp, 1)
    w4q = w4q_ref[...]      # (1, Dp)
    w4m = w4mlu_ref[...]    # (1, Dp)
    bias = bias_ref[...]    # (1, 1)

    c32 = c.astype(jnp.float32)
    qt32 = qt.astype(jnp.float32)
    c_bf = c.astype(jnp.bfloat16)
    q_bf = q.astype(jnp.bfloat16)

    # ---- trilinear scores in transposed orientation St = S^T : (Lkp, Lcp) --
    # sub0 / sub1 stay off the MXU (VPU multiply + XLU reduction); the score
    # matmul uses bf16 operands with f32 accumulation (native MXU rate).
    sub0 = jnp.sum(c32 * w4c, axis=0, keepdims=True)            # (1, Lcp)
    sub1 = jnp.sum(qt32 * w4q, axis=-1, keepdims=True)          # (Lkp, 1)
    lhs_bf = (qt32 * w4m).astype(jnp.bfloat16)                  # (Lkp, Dp)
    st = jnp.dot(lhs_bf, c_bf,
                 preferred_element_type=jnp.float32)            # (Lkp, Lcp)
    st = st + sub0 + sub1 + bias

    neg = jnp.float32(-1e30)
    # softmax over k  (torch dim=2)  -> axis 0 of St
    s1t = _softmax(st + neg * (1.0 - qmask), axis=0, use_bf16_exp=use_bf16_exp)
    # softmax over Lc (torch dim=1)  -> axis -1 of St
    s2t = _softmax(st + neg * (1.0 - cmask), axis=-1, use_bf16_exp=use_bf16_exp)

    # ---- output matmuls: bf16 operands, f32 accumulation on the MXU ----
    s1_bf = s1t.astype(jnp.bfloat16)
    s2_bf = s2t.astype(jnp.bfloat16)

    # A^T (channel-first): (Dp, Lcp) = Q_ch @ S1^T
    a_ch = jnp.dot(q_bf, s1_bf, preferred_element_type=jnp.float32)
    # Reassociated B: T = C_ch @ S2 -> (Dp, Lkp); B^T = T @ S1^T -> (Dp, Lcp).
    t_ch = lax.dot_general(c_bf, s2_bf, (((1,), (1,)), ((), ())),
                           preferred_element_type=jnp.float32)
    b_ch = jnp.dot(t_ch.astype(jnp.bfloat16), s1_bf,
                   preferred_element_type=jnp.float32)

    # ---- direct slab stores (no concatenate, no output transpose) ----
    od = out_ref.dtype
    out_ref[0, 0:Dp, :] = c.astype(od)
    out_ref[0, Dp:2 * Dp, :] = a_ch.astype(od)
    out_ref[0, 2 * Dp:3 * Dp, :] = (c32 * a_ch).astype(od)
    out_ref[0, 3 * Dp:4 * Dp, :] = (c32 * b_ch).astype(od)


def _pad_axis(x, axis, multiple):
    pad = (-x.shape[axis]) % multiple
    if pad == 0:
        return x
    widths = [(0, 0)] * x.ndim
    widths[axis] = (0, pad)
    return jnp.pad(x, widths)


def _device_kind():
    try:
        return jax.devices()[0].device_kind.lower()
    except Exception:
        return ""


def _vmem_limit_bytes(Dp, Lcp, Lkp, in_itemsize, out_itemsize):
    f32 = 4
    # Double-buffered pipeline blocks (inputs + output).  The x2 is the
    # double-buffer factor and is applied exactly once (no extra global x2).
    blocks = 2 * ((Dp * Lcp + 2 * Dp * Lkp) * in_itemsize
                  + 4 * Dp * Lcp * out_itemsize
                  + (Lcp + Lkp + 3 * Dp + 1) * f32)
    # In-kernel temporaries: f32 scores/softmaxes + bf16 copies, products.
    scratch = (5 * Lkp * Lcp + 6 * Dp * Lcp + 3 * Dp * Lkp) * f32
    est = blocks + scratch
    kind = _device_kind()
    # v7x has only 64 MiB physical VMEM per TC -> leave compiler headroom.
    cap = (48 << 20) if ("v7" in kind or "7x" in kind) else (100 << 20)
    # >= 32 MiB overrides v5e's 16 MiB scoped default.
    return int(min(max(est, 32 << 20), cap))


def cq_attention(C, Q, Cmask, Qmask, w4C, w4Q, w4mlu, bias, out_dtype=None):
    """C: (B, D, Lc), Q: (B, D, Lk), Cmask: (B, Lc), Qmask: (B, Lk) -> (B, 4D, Lc)."""
    Bsz, D, Lc = C.shape
    Lk = Q.shape[2]
    if out_dtype is None:
        out_dtype = C.dtype   # downstream may pass jnp.bfloat16 to halve writeback

    Dp = D + (-D) % 16         # bf16 sublane multiple (operands are cast to bf16)
    Lcp = Lc + (-Lc) % 128     # lane multiple
    Lkp = Lk + (-Lk) % 128     # lane multiple

    # Inputs stay in their native dtype and channel-first layout (no f32
    # upcast, no full-tensor transposes of C or the 4x output).  Padded
    # positions are zero and excluded from both softmaxes via the masks.
    Cp = _pad_axis(_pad_axis(C, 1, 16), 2, 128)                    # (B, Dp, Lcp)
    Qp = _pad_axis(_pad_axis(Q, 1, 16), 2, 128)                    # (B, Dp, Lkp)
    Qtp = jnp.transpose(Qp, (0, 2, 1))                             # (B, Lkp, Dp) -- tiny tensor
    cmask = _pad_axis(Cmask.astype(jnp.float32), 1, 128)[:, None, :]   # (B, 1, Lcp)
    qmask = _pad_axis(Qmask.astype(jnp.float32), 1, 128)[:, :, None]   # (B, Lkp, 1)

    w4c = _pad_axis(jnp.reshape(w4C, (D, 1)).astype(jnp.float32), 0, 16)    # (Dp, 1)
    w4q = _pad_axis(jnp.reshape(w4Q, (1, D)).astype(jnp.float32), 1, 16)    # (1, Dp)
    w4m = _pad_axis(jnp.reshape(w4mlu, (1, D)).astype(jnp.float32), 1, 16)  # (1, Dp)
    b = jnp.reshape(bias, (1, 1)).astype(jnp.float32)

    kind = _device_kind()
    use_bf16_exp = ("v6" in kind) or ("v7" in kind) or ("7x" in kind)

    out_p = pl.pallas_call(
        functools.partial(cq_attention_kernel, use_bf16_exp=use_bf16_exp),
        out_shape=jax.ShapeDtypeStruct((Bsz, 4 * Dp, Lcp), out_dtype),
        grid=(Bsz,),
        in_specs=[
            pl.BlockSpec((1, Dp, Lcp), lambda i: (i, 0, 0)),   # C  (channel-first)
            pl.BlockSpec((1, Dp, Lkp), lambda i: (i, 0, 0)),   # Q  (channel-first)
            pl.BlockSpec((1, Lkp, Dp), lambda i: (i, 0, 0)),   # Q^T (seq-major)
            pl.BlockSpec((1, 1, Lcp), lambda i: (i, 0, 0)),    # cmask
            pl.BlockSpec((1, Lkp, 1), lambda i: (i, 0, 0)),    # qmask
            pl.BlockSpec((Dp, 1), lambda i: (0, 0)),           # w4C
            pl.BlockSpec((1, Dp), lambda i: (0, 0)),           # w4Q
            pl.BlockSpec((1, Dp), lambda i: (0, 0)),           # w4mlu
            pl.BlockSpec((1, 1), lambda i: (0, 0)),            # bias
        ],
        out_specs=pl.BlockSpec((1, 4 * Dp, Lcp), lambda i: (i, 0, 0)),
        compiler_params=pltpu.CompilerParams(
            dimension_semantics=("parallel",),
            vmem_limit_bytes=_vmem_limit_bytes(
                Dp, Lcp, Lkp, C.dtype.itemsize, jnp.dtype(out_dtype).itemsize),
        ),
    )(Cp, Qp, Qtp, cmask, qmask, w4c, w4q, w4m, b)

    # Strip padding; output is already (B, 4D, Lc) channel-first -> no transpose.
    if Dp != D:
        out = jnp.concatenate(
            [out_p[:, s * Dp:s * Dp + D, :Lc] for s in range(4)], axis=1)
    else:
        out = out_p[:, :, :Lc]
    return out


def cq_attention_ref(C, Q, Cmask, Qmask, w4C, w4Q, w4mlu, bias):
    """Pure-JAX reference mirroring the PyTorch forward (inference mode)."""
    Ct = jnp.transpose(C, (0, 2, 1)).astype(jnp.float32)
    Qt = jnp.transpose(Q, (0, 2, 1)).astype(jnp.float32)
    Bsz, Lc, D = Ct.shape
    Lk = Qt.shape[1]
    sub0 = jnp.matmul(Ct, w4C)                                   # (B, Lc, 1)
    sub1 = jnp.transpose(jnp.matmul(Qt, w4Q), (0, 2, 1))         # (B, 1, Lk)
    sub2 = jnp.matmul(Ct * w4mlu, jnp.transpose(Qt, (0, 2, 1)))  # (B, Lc, Lk)
    S = sub0 + sub1 + sub2 + bias
    cm = Cmask.astype(jnp.float32).reshape(Bsz, Lc, 1)
    qm = Qmask.astype(jnp.float32).reshape(Bsz, 1, Lk)
    S1 = jax.nn.softmax(S + (-1e30) * (1.0 - qm), axis=2)
    S2 = jax.nn.softmax(S + (-1e30) * (1.0 - cm), axis=1)
    A = jnp.matmul(S1, Qt)
    Bm = jnp.matmul(jnp.matmul(S1, jnp.transpose(S2, (0, 2, 1))), Ct)
    out = jnp.concatenate([Ct, A, Ct * A, Ct * Bm], axis=2)
    return jnp.transpose(out, (0, 2, 1))


if __name__ == "__main__":
    # Small shapes: batch=2, hidden=32, q_len(context)=8, k_len(query)=8
    Bsz, D, Lc, Lk = 2, 32, 8, 8

    key = jax.random.PRNGKey(0)
    kC, kQ, kwc, kwq, kwm = jax.random.split(key, 5)

    C = jax.random.normal(kC, (Bsz, D, Lc), dtype=jnp.float32)
    Q = jax.random.normal(kQ, (Bsz, D, Lk), dtype=jnp.float32)

    # Padding-style masks (1 = valid, 0 = padded)
    Cmask = jnp.ones((Bsz, Lc), dtype=jnp.float32).at[1, Lc - 2:].set(0.0)
    Qmask = jnp.ones((Bsz, Lk), dtype=jnp.float32).at[0, Lk - 1:].set(0.0)

    # Deterministic xavier_uniform-style parameter init (matches module shapes)
    bound_vec = math.sqrt(6.0 / (D + 1))        # w4C / w4Q: shape (D, 1)
    bound_mlu = math.sqrt(6.0 / (2.0 * D))      # w4mlu: shape (1, 1, D)
    w4C = jax.random.uniform(kwc, (D, 1), jnp.float32, -bound_vec, bound_vec)
    w4Q = jax.random.uniform(kwq, (D, 1), jnp.float32, -bound_vec, bound_vec)
    w4mlu = jax.random.uniform(kwm, (1, 1, D), jnp.float32, -bound_mlu, bound_mlu)
    bias = jnp.zeros((1,), dtype=jnp.float32)

    out = cq_attention(C, Q, Cmask, Qmask, w4C, w4Q, w4mlu, bias)
    out = jax.block_until_ready(out)

    ref = jax.block_until_ready(
        cq_attention_ref(C, Q, Cmask, Qmask, w4C, w4Q, w4mlu, bias))
    assert out.shape == (Bsz, 4 * D, Lc), out.shape
    np.testing.assert_allclose(np.asarray(out), np.asarray(ref), rtol=2e-2, atol=2e-2)

    print("KERNEL_OK")
</pallas_src>

<mosaic_0001>
module attributes {stable_mosaic.version = 11 : i64} {
  func.func @cq_attention_kernel(%arg0: i32, %arg1: memref<1x32x128xf32, #tpu.memory_space<vmem>>, %arg2: memref<1x32x128xf32, #tpu.memory_space<vmem>>, %arg3: memref<1x128x32xf32, #tpu.memory_space<vmem>>, %arg4: memref<1x1x128xf32, #tpu.memory_space<vmem>>, %arg5: memref<1x128x1xf32, #tpu.memory_space<vmem>>, %arg6: memref<32x1xf32, #tpu.memory_space<vmem>>, %arg7: memref<1x32xf32, #tpu.memory_space<vmem>>, %arg8: memref<1x32xf32, #tpu.memory_space<vmem>>, %arg9: memref<1x1xf32, #tpu.memory_space<vmem>>, %arg10: memref<1x128x128xf32, #tpu.memory_space<vmem>>) attributes {dimension_semantics = [#tpu.dimension_semantics<parallel>], iteration_bounds = array<i64: 2>, scalar_prefetch = 0 : i64, scratch_operands = 0 : i64, tpu.core_type = #tpu.core_type<tc>, window_params = [{transform_indices = @transform_0, window_bounds = array<i64: 1, 32, 128>}, {transform_indices = @transform_1, window_bounds = array<i64: 1, 32, 128>}, {transform_indices = @transform_2, window_bounds = array<i64: 1, 128, 32>}, {transform_indices = @transform_3, window_bounds = array<i64: 1, 1, 128>}, {transform_indices = @transform_4, window_bounds = array<i64: 1, 128, 1>}, {pipeline_mode = #tpu.pipeline_mode<synchronous>, transform_indices = @transform_5, window_bounds = array<i64: 32, 1>}, {pipeline_mode = #tpu.pipeline_mode<synchronous>, transform_indices = @transform_6, window_bounds = array<i64: 1, 32>}, {pipeline_mode = #tpu.pipeline_mode<synchronous>, transform_indices = @transform_7, window_bounds = array<i64: 1, 32>}, {pipeline_mode = #tpu.pipeline_mode<synchronous>, transform_indices = @transform_8, window_bounds = array<i64: 1, 1>}, {transform_indices = @transform_9, window_bounds = array<i64: 1, 128, 128>}]} {
    %c0 = arith.constant 0 : index
    %c0_0 = arith.constant 0 : index
    %c0_1 = arith.constant 0 : index
    %0 = vector.load %arg1[%c0, %c0_0, %c0_1] : memref<1x32x128xf32, #tpu.memory_space<vmem>>, vector<1x32x128xf32>
    %1 = vector.shape_cast %0 : vector<1x32x128xf32> to vector<32x128xf32>
    %c0_2 = arith.constant 0 : index
    %c0_3 = arith.constant 0 : index
    %c0_4 = arith.constant 0 : index
    %2 = vector.load %arg2[%c0_2, %c0_3, %c0_4] : memref<1x32x128xf32, #tpu.memory_space<vmem>>, vector<1x32x128xf32>
    %3 = vector.shape_cast %2 : vector<1x32x128xf32> to vector<32x128xf32>
    %c0_5 = arith.constant 0 : index
    %c0_6 = arith.constant 0 : index
    %c0_7 = arith.constant 0 : index
    %4 = vector.load %arg3[%c0_5, %c0_6, %c0_7] : memref<1x128x32xf32, #tpu.memory_space<vmem>>, vector<1x128x32xf32>
    %5 = vector.shape_cast %4 : vector<1x128x32xf32> to vector<128x32xf32>
    %c0_8 = arith.constant 0 : index
    %c0_9 = arith.constant 0 : index
    %c0_10 = arith.constant 0 : index
    %6 = vector.load %arg4[%c0_8, %c0_9, %c0_10] : memref<1x1x128xf32, #tpu.memory_space<vmem>>, vector<1x1x128xf32>
    %7 = vector.shape_cast %6 : vector<1x1x128xf32> to vector<1x128xf32>
    %c0_11 = arith.constant 0 : index
    %c0_12 = arith.constant 0 : index
    %c0_13 = arith.constant 0 : index
    %8 = vector.load %arg5[%c0_11, %c0_12, %c0_13] : memref<1x128x1xf32, #tpu.memory_space<vmem>>, vector<1x128x1xf32>
    %9 = vector.shape_cast %8 : vector<1x128x1xf32> to vector<128x1xf32>
    %c0_14 = arith.constant 0 : index
    %c0_15 = arith.constant 0 : index
    %10 = vector.load %arg6[%c0_14, %c0_15] : memref<32x1xf32, #tpu.memory_space<vmem>>, vector<32x1xf32>
    %c0_16 = arith.constant 0 : index
    %c0_17 = arith.constant 0 : index
    %11 = vector.load %arg7[%c0_16, %c0_17] : memref<1x32xf32, #tpu.memory_space<vmem>>, vector<1x32xf32>
    %c0_18 = arith.constant 0 : index
    %c0_19 = arith.constant 0 : index
    %12 = vector.load %arg8[%c0_18, %c0_19] : memref<1x32xf32, #tpu.memory_space<vmem>>, vector<1x32xf32>
    %c0_20 = arith.constant 0 : index
    %c0_21 = arith.constant 0 : index
    %13 = vector.load %arg9[%c0_20, %c0_21] : memref<1x1xf32, #tpu.memory_space<vmem>>, vector<1x1xf32>
    %14 = arith.truncf %1 : vector<32x128xf32> to vector<32x128xbf16>
    %15 = arith.truncf %3 : vector<32x128xf32> to vector<32x128xbf16>
    %16 = vector.broadcast %10 : vector<32x1xf32> to vector<32x128xf32>
    %17 = arith.mulf %1, %16 : vector<32x128xf32>
    %cst = arith.constant dense<0.000000e+00> : vector<128xf32>
    %18 = vector.multi_reduction <add>, %17, %cst [0] : vector<32x128xf32> to vector<128xf32>
    %19 = vector.shape_cast %18 : vector<128xf32> to vector<1x128xf32>
    %20 = vector.broadcast %11 : vector<1x32xf32> to vector<128x32xf32>
    %21 = arith.mulf %5, %20 : vector<128x32xf32>
    %cst_22 = arith.constant dense<0.000000e+00> : vector<128xf32>
    %22 = vector.multi_reduction <add>, %21, %cst_22 [1] : vector<128x32xf32> to vector<128xf32>
    %23 = vector.shape_cast %22 : vector<128xf32> to vector<128x1xf32>
    %24 = vector.broadcast %12 : vector<1x32xf32> to vector<128x32xf32>
    %25 = arith.mulf %5, %24 : vector<128x32xf32>
    %26 = arith.truncf %25 : vector<128x32xf32> to vector<128x32xbf16>
    %cst_23 = arith.constant dense<0.000000e+00> : vector<128x128xf32>
    %27 = tpu.matmul %26, %14, %cst_23 {dimension_numbers = #tpu.dot_dimension_numbers<[1], [0], [0], [1], [0, 0, 1, 1], [], []>} : vector<128x32xbf16>, vector<32x128xbf16>, vector<128x128xf32> -> vector<128x128xf32>
    %28 = vector.broadcast %19 : vector<1x128xf32> to vector<128x128xf32>
    %29 = arith.addf %27, %28 : vector<128x128xf32>
    %30 = vector.broadcast %23 : vector<128x1xf32> to vector<128x128xf32>
    %31 = arith.addf %29, %30 : vector<128x128xf32>
    %32 = vector.broadcast %13 : vector<1x1xf32> to vector<128x128xf32>
    %33 = arith.addf %31, %32 : vector<128x128xf32>
    %cst_24 = arith.constant 1.000000e+00 : f32
    %34 = vector.broadcast %cst_24 : f32 to vector<128x1xf32>
    %35 = arith.subf %34, %9 : vector<128x1xf32>
    %cst_25 = arith.constant -1.000000e+30 : f32
    %36 = vector.broadcast %cst_25 : f32 to vector<128x1xf32>
    %37 = arith.mulf %36, %35 : vector<128x1xf32>
    %38 = vector.broadcast %37 : vector<128x1xf32> to vector<128x128xf32>
    %39 = arith.addf %33, %38 : vector<128x128xf32>
    %cst_26 = arith.constant dense<0xFF800000> : vector<128xf32>
    %40 = vector.multi_reduction <maximumf>, %39, %cst_26 [0] : vector<128x128xf32> to vector<128xf32>
    %41 = vector.shape_cast %40 : vector<128xf32> to vector<1x128xf32>
    %42 = vector.broadcast %41 : vector<1x128xf32> to vector<128x128xf32>
    %43 = arith.subf %39, %42 : vector<128x128xf32>
    %44 = math.exp %43 : vector<128x128xf32>
    %cst_27 = arith.constant dense<0.000000e+00> : vector<128xf32>
    %45 = vector.multi_reduction <add>, %44, %cst_27 [0] : vector<128x128xf32> to vector<128xf32>
    %46 = vector.shape_cast %45 : vector<128xf32> to vector<1x128xf32>
    %47 = tpu.reciprocal %46 {approx = true} : vector<1x128xf32> -> vector<1x128xf32>
    %48 = vector.broadcast %47 : vector<1x128xf32> to vector<128x128xf32>
    %49 = arith.mulf %44, %48 : vector<128x128xf32>
    %cst_28 = arith.constant 1.000000e+00 : f32
    %50 = vector.broadcast %cst_28 : f32 to vector<1x128xf32>
    %51 = arith.subf %50, %7 : vector<1x128xf32>
    %cst_29 = arith.constant -1.000000e+30 : f32
    %52 = vector.broadcast %cst_29 : f32 to vector<1x128xf32>
    %53 = arith.mulf %52, %51 : vector<1x128xf32>
    %54 = vector.broadcast %53 : vector<1x128xf32> to vector<128x128xf32>
    %55 = arith.addf %33, %54 : vector<128x128xf32>
    %cst_30 = arith.constant dense<0xFF800000> : vector<128xf32>
    %56 = vector.multi_reduction <maximumf>, %55, %cst_30 [1] : vector<128x128xf32> to vector<128xf32>
    %57 = vector.shape_cast %56 : vector<128xf32> to vector<128x1xf32>
    %58 = vector.broadcast %57 : vector<128x1xf32> to vector<128x128xf32>
    %59 = arith.subf %55, %58 : vector<128x128xf32>
    %60 = math.exp %59 : vector<128x128xf32>
    %cst_31 = arith.constant dense<0.000000e+00> : vector<128xf32>
    %61 = vector.multi_reduction <add>, %60, %cst_31 [1] : vector<128x128xf32> to vector<128xf32>
    %62 = vector.shape_cast %61 : vector<128xf32> to vector<128x1xf32>
    %63 = tpu.reciprocal %62 {approx = true} : vector<128x1xf32> -> vector<128x1xf32>
    %64 = vector.broadcast %63 : vector<128x1xf32> to vector<128x128xf32>
    %65 = arith.mulf %60, %64 : vector<128x128xf32>
    %66 = arith.truncf %49 : vector<128x128xf32> to vector<128x128xbf16>
    %67 = arith.truncf %65 : vector<128x128xf32> to vector<128x128xbf16>
    %cst_32 = arith.constant dense<0.000000e+00> : vector<32x128xf32>
    %68 = tpu.matmul %15, %66, %cst_32 {dimension_numbers = #tpu.dot_dimension_numbers<[1], [0], [0], [1], [0, 0, 1, 1], [], []>} : vector<32x128xbf16>, vector<128x128xbf16>, vector<32x128xf32> -> vector<32x128xf32>
    %cst_33 = arith.constant dense<0.000000e+00> : vector<32x128xf32>
    %69 = tpu.matmul %14, %67, %cst_33 {dimension_numbers = #tpu.dot_dimension_numbers<[1], [1], [0], [0], [0, 0, 1, 0], [], []>} : vector<32x128xbf16>, vector<128x128xbf16>, vector<32x128xf32> -> vector<32x128xf32>
    %70 = arith.truncf %69 : vector<32x128xf32> to vector<32x128xbf16>
    %cst_34 = arith.constant dense<0.000000e+00> : vector<32x128xf32>
    %71 = tpu.matmul %70, %66, %cst_34 {dimension_numbers = #tpu.dot_dimension_numbers<[1], [0], [0], [1], [0, 0, 1, 1], [], []>} : vector<32x128xbf16>, vector<128x128xbf16>, vector<32x128xf32> -> vector<32x128xf32>
    %c0_35 = arith.constant 0 : index
    %c0_36 = arith.constant 0 : index
    %c0_37 = arith.constant 0 : index
    %72 = vector.load %arg10[%c0_35, %c0_36, %c0_37] : memref<1x128x128xf32, #tpu.memory_space<vmem>>, vector<1x32x128xf32>
    %73 = vector.shape_cast %72 : vector<1x32x128xf32> to vector<32x128xf32>
    %74 = vector.shape_cast %1 : vector<32x128xf32> to vector<1x32x128xf32>
    tpu.vector_store %arg10[%c0_35, %c0_36, %c0_37], %74 {strides = array<i32>} : memref<1x128x128xf32, #tpu.memory_space<vmem>>, vector<1x32x128xf32>,
    %c0_38 = arith.constant 0 : index
    %c32 = arith.constant 32 : index
    %c0_39 = arith.constant 0 : index
    %75 = vector.load %arg10[%c0_38, %c32, %c0_39] : memref<1x128x128xf32, #tpu.memory_space<vmem>>, vector<1x32x128xf32>
    %76 = vector.shape_cast %75 : vector<1x32x128xf32> to vector<32x128xf32>
    %77 = vector.shape_cast %68 : vector<32x128xf32> to vector<1x32x128xf32>
    tpu.vector_store %arg10[%c0_38, %c32, %c0_39], %77 {strides = array<i32>} : memref<1x128x128xf32, #tpu.memory_space<vmem>>, vector<1x32x128xf32>,
    %78 = arith.mulf %1, %68 : vector<32x128xf32>
    %c0_40 = arith.constant 0 : index
    %c64 = arith.constant 64 : index
    %c0_41 = arith.constant 0 : index
    %79 = vector.load %arg10[%c0_40, %c64, %c0_41] : memref<1x128x128xf32, #tpu.memory_space<vmem>>, vector<1x32x128xf32>
    %80 = vector.shape_cast %79 : vector<1x32x128xf32> to vector<32x128xf32>
    %81 = vector.shape_cast %78 : vector<32x128xf32> to vector<1x32x128xf32>
    tpu.vector_store %arg10[%c0_40, %c64, %c0_41], %81 {strides = array<i32>} : memref<1x128x128xf32, #tpu.memory_space<vmem>>, vector<1x32x128xf32>,
    %82 = arith.mulf %1, %71 : vector<32x128xf32>
    %c0_42 = arith.constant 0 : index
    %c96 = arith.constant 96 : index
    %c0_43 = arith.constant 0 : index
    %83 = vector.load %arg10[%c0_42, %c96, %c0_43] : memref<1x128x128xf32, #tpu.memory_space<vmem>>, vector<1x32x128xf32>
    %84 = vector.shape_cast %83 : vector<1x32x128xf32> to vector<32x128xf32>
    %85 = vector.shape_cast %82 : vector<32x128xf32> to vector<1x32x128xf32>
    tpu.vector_store %arg10[%c0_42, %c96, %c0_43], %85 {strides = array<i32>} : memref<1x128x128xf32, #tpu.memory_space<vmem>>, vector<1x32x128xf32>,
    return
  }
  func.func @transform_0(%arg0: i32) -> (i32, i32, i32) {
    %c0_i32 = arith.constant 0 : i32
    %c0_i32_0 = arith.constant 0 : i32
    %c0_i32_1 = arith.constant 0 : i32
    return %arg0, %c0_i32, %c0_i32_0 : i32, i32, i32
  }
  func.func @transform_1(%arg0: i32) -> (i32, i32, i32) {
    %c0_i32 = arith.constant 0 : i32
    %c0_i32_0 = arith.constant 0 : i32
    %c0_i32_1 = arith.constant 0 : i32
    return %arg0, %c0_i32, %c0_i32_0 : i32, i32, i32
  }
  func.func @transform_2(%arg0: i32) -> (i32, i32, i32) {
    %c0_i32 = arith.constant 0 : i32
    %c0_i32_0 = arith.constant 0 : i32
    %c0_i32_1 = arith.constant 0 : i32
    return %arg0, %c0_i32, %c0_i32_0 : i32, i32, i32
  }
  func.func @transform_3(%arg0: i32) -> (i32, i32, i32) {
    %c0_i32 = arith.constant 0 : i32
    %c0_i32_0 = arith.constant 0 : i32
    %c0_i32_1 = arith.constant 0 : i32
    return %arg0, %c0_i32, %c0_i32_0 : i32, i32, i32
  }
  func.func @transform_4(%arg0: i32) -> (i32, i32, i32) {
    %c0_i32 = arith.constant 0 : i32
    %c0_i32_0 = arith.constant 0 : i32
    %c0_i32_1 = arith.constant 0 : i32
    return %arg0, %c0_i32, %c0_i32_0 : i32, i32, i32
  }
  func.func @transform_5(%arg0: i32) -> (i32, i32) {
    %c0_i32 = arith.constant 0 : i32
    %c0_i32_0 = arith.constant 0 : i32
    %c0_i32_1 = arith.constant 0 : i32
    return %c0_i32, %c0_i32_0 : i32, i32
  }
  func.func @transform_6(%arg0: i32) -> (i32, i32) {
    %c0_i32 = arith.constant 0 : i32
    %c0_i32_0 = arith.constant 0 : i32
    %c0_i32_1 = arith.constant 0 : i32
    return %c0_i32, %c0_i32_0 : i32, i32
  }
  func.func @transform_7(%arg0: i32) -> (i32, i32) {
    %c0_i32 = arith.constant 0 : i32
    %c0_i32_0 = arith.constant 0 : i32
    %c0_i32_1 = arith.constant 0 : i32
    return %c0_i32, %c0_i32_0 : i32, i32
  }
  func.func @transform_8(%arg0: i32) -> (i32, i32) {
    %c0_i32 = arith.constant 0 : i32
    %c0_i32_0 = arith.constant 0 : i32
    %c0_i32_1 = arith.constant 0 : i32
    return %c0_i32, %c0_i32_0 : i32, i32
  }
  func.func @transform_9(%arg0: i32) -> (i32, i32, i32) {
    %c0_i32 = arith.constant 0 : i32
    %c0_i32_0 = arith.constant 0 : i32
    %c0_i32_1 = arith.constant 0 : i32
    return %arg0, %c0_i32, %c0_i32_0 : i32, i32, i32
  }
}

</mosaic_0001>

<llo_original>
// kernel: tpu_custom_call.1
$region0: #{tpu_custom_call.1}
  #allocation0 [shape = 'u32[]', space=smem, size = 0x4, offset = 0x4, fixed_abs, tag = 'smem constant byte address 0x4 - core index']
  #allocation1 [shape = 'u32[72,128]{1,0:T(1,128)}', space=vmem, size = 0x9000, scoped, tag = 'internal scratch']
  #allocation2 [shape = 'f32[1,1]{1,0:T(1,128)S(1)}', space=vmem, size = 0x200, scoped, tag = 'scoped memory for tpu_custom_call.1']
  %s0 = inlined_call_operand.vmem [shape: f32[2,32,128], index: 0, kind: input, shape index: {}]
  %s1 = inlined_call_operand.vmem [shape: f32[2,32,128], index: 1, kind: input, shape index: {}]
  %s2 = inlined_call_operand.vmem [shape: f32[2,128,32], index: 2, kind: input, shape index: {}]
  %s3 = inlined_call_operand.vmem [shape: f32[2,1,128], index: 3, kind: input, shape index: {}]
  %s4 = inlined_call_operand.vmem [shape: f32[2,128,1], index: 4, kind: input, shape index: {}]
  %s5 = inlined_call_operand.vmem [shape: f32[32,1], index: 5, kind: input, shape index: {}]
  %s6 = inlined_call_operand.vmem [shape: f32[1,32], index: 6, kind: input, shape index: {}]
  %s7 = inlined_call_operand.vmem [shape: f32[1,32], index: 7, kind: input, shape index: {}]
  %s8 = inlined_call_operand.<no memory space> [shape: f32[1,1], index: 8, kind: input, shape index: {}]
  %s9 = inlined_call_operand.hbm [shape: f32[2,128,128], index: 9, kind: output, shape index: {}]
  %s10 = sld [smem:[#allocation0]]
  $region69: #{tpu_custom_call.1} parent=0
    _
  %s12 = ssub.s32 1, %s10
  %s13 = scalar_select 0, %s12, %s10
  %v14 = vstv %s8
  %15 = vst [vmem:[#allocation2] sm:$0x1] %v14
  $region1: #{tpu_custom_call.1} parent=0
    #allocation3 [shape = 'u8[131072]{0}', space=vmem, size = 0x20000, scoped, tag = 'output window, operand 0']
    #allocation4 [shape = 's32[2]{0}', space=sflag, size = 0x8, scoped, tag = 'scoped memory for tpu_custom_call.1']
    %16 = vsyncpa [#allocation4], 0
    %s17 = scalar_lea.sflag [#allocation4], 1
    %18 = vsyncpa %s17, 0
    loop: start=0, step=1, limit=4
    $region2: #{tpu_custom_call.1} parent=1 // loop_pre_header
      _
    $region3: #{tpu_custom_call.1} parent=1 // loop_header
      %s20 = sphi 0, %s24
      %p21 = scmp.ge.s32.totalorder %s20, 4
      %s30 = sphi 0, %s32
      %s33 = sphi 0, %s30
      %s34 = sphi 0, %s33
      %s50 = sphi 0, %s34
      %s56 = sphi 0, %s58
      %s59 = sphi 0, %s56
      %s60 = sphi 0, %s59
      %s76 = sphi 0, %s60
      %s82 = sphi 0, %s84
      %s85 = sphi 0, %s82
      %s86 = sphi 0, %s85
      %s102 = sphi 0, %s86
      %s108 = sphi 0, %s110
      %s111 = sphi 0, %s108
      %s112 = sphi 0, %s111
      %s128 = sphi 0, %s112
      %s134 = sphi 0, %s136
      %s137 = sphi 0, %s134
      %s138 = sphi 0, %s137
      %s154 = sphi 0, %s138
      %s158 = sphi 0, %s158
      %s160 = sphi 0, %s158
      %s161 = sphi 0, %s160
      %s175 = sphi 0, %s161
      %s179 = sphi 0, %s179
      %s181 = sphi 0, %s179
      %s182 = sphi 0, %s181
      %s196 = sphi 0, %s182
      %s200 = sphi 0, %s200
      %s202 = sphi 0, %s200
      %s203 = sphi 0, %s202
      %s217 = sphi 0, %s203
      %s221 = sphi 0, %s221
      %s223 = sphi 0, %s221
      %s224 = sphi 0, %s223
      %s238 = sphi 0, %s224
      %s244 = sphi 0, %s246
      %s247 = sphi 0, %s244
      %s248 = sphi 0, %s247
      %s264 = sphi 0, %s248
    $region4: #{tpu_custom_call.1} parent=1 // loop_header_branch
      %23 = sbr.rel (%p21) target = $region8
    $region5: #{tpu_custom_call.1} parent=1 // loop_body
      %s25 = ssub.s32 %s20, 1
      %s26 = ssub.s32 %s20, 2
      %s27 = sadd.s32 %s20, 1
      %s28 = ssub.s32 %s20, %s27
      %p29 = scmp.eq.s32.totalorder %s28, 0
      %s31 = sadd.s32 %s30, 1
      %s32 = scalar_select %p29, %s30, %s31
      %p35 = pneg %p29
      %p36 = scmp.eq.s32.totalorder %s20, 1
      %p37 = por %p35, %p36
      %p38 = scmp.ne.s32.totalorder %s30, %s33
      %p39 = scmp.eq.s32.totalorder %s20, 0
      %p40 = por %p38, %p39
      %p41 = scmp.ne.s32.totalorder %s30, %s33
      %p42 = scmp.eq.s32.totalorder %s25, 1
      %p43 = por %p41, %p42
      %p44 = scmp.ne.s32.totalorder %s33, %s34
      %p45 = scmp.eq.s32.totalorder %s25, 0
      %p46 = por %p44, %p45
      %p47 = scmp.ne.s32.totalorder %s33, %s34
      %p48 = scmp.eq.s32.totalorder %s26, 1
      %p49 = por %p47, %p48
      %p51 = scmp.ne.s32.totalorder %s34, %s50
      %p52 = scmp.eq.s32.totalorder %s26, 0
      %p53 = por %p51, %p52
      %s54 = ssub.s32 %s20, %s27
      %p55 = scmp.eq.s32.totalorder %s54, 0
      %s57 = sadd.s32 %s56, 1
      %s58 = scalar_select %p55, %s56, %s57
      %p61 = pneg %p55
      %p62 = scmp.eq.s32.totalorder %s20, 1
      %p63 = por %p61, %p62
      %p64 = scmp.ne.s32.totalorder %s56, %s59
      %p65 = scmp.eq.s32.totalorder %s20, 0
      %p66 = por %p64, %p65
      %p67 = scmp.ne.s32.totalorder %s56, %s59
      %p68 = scmp.eq.s32.totalorder %s25, 1
      %p69 = por %p67, %p68
      %p70 = scmp.ne.s32.totalorder %s59, %s60
      %p71 = scmp.eq.s32.totalorder %s25, 0
      %p72 = por %p70, %p71
      %p73 = scmp.ne.s32.totalorder %s59, %s60
      %p74 = scmp.eq.s32.totalorder %s26, 1
      %p75 = por %p73, %p74
      %p77 = scmp.ne.s32.totalorder %s60, %s76
      %p78 = scmp.eq.s32.totalorder %s26, 0
      %p79 = por %p77, %p78
      %s80 = ssub.s32 %s20, %s27
      %p81 = scmp.eq.s32.totalorder %s80, 0
      %s83 = sadd.s32 %s82, 1
      %s84 = scalar_select %p81, %s82, %s83
      %p87 = pneg %p81
      %p88 = scmp.eq.s32.totalorder %s20, 1
      %p89 = por %p87, %p88
      %p90 = scmp.ne.s32.totalorder %s82, %s85
      %p91 = scmp.eq.s32.totalorder %s20, 0
      %p92 = por %p90, %p91
      %p93 = scmp.ne.s32.totalorder %s82, %s85
      %p94 = scmp.eq.s32.totalorder %s25, 1
      %p95 = por %p93, %p94
      %p96 = scmp.ne.s32.totalorder %s85, %s86
      %p97 = scmp.eq.s32.totalorder %s25, 0
      %p98 = por %p96, %p97
      %p99 = scmp.ne.s32.totalorder %s85, %s86
      %p100 = scmp.eq.s32.totalorder %s26, 1
      %p101 = por %p99, %p100
      %p103 = scmp.ne.s32.totalorder %s86, %s102
      %p104 = scmp.eq.s32.totalorder %s26, 0
      %p105 = por %p103, %p104
      %s106 = ssub.s32 %s20, %s27
      %p107 = scmp.eq.s32.totalorder %s106, 0
      %s109 = sadd.s32 %s108, 1
      %s110 = scalar_select %p107, %s108, %s109
      %p113 = pneg %p107
      %p114 = scmp.eq.s32.totalorder %s20, 1
      %p115 = por %p113, %p114
      %p116 = scmp.ne.s32.totalorder %s108, %s111
      %p117 = scmp.eq.s32.totalorder %s20, 0
      %p118 = por %p116, %p117
      %p119 = scmp.ne.s32.totalorder %s108, %s111
      %p120 = scmp.eq.s32.totalorder %s25, 1
      %p121 = por %p119, %p120
      %p122 = scmp.ne.s32.totalorder %s111, %s112
      %p123 = scmp.eq.s32.totalorder %s25, 0
      %p124 = por %p122, %p123
      %p125 = scmp.ne.s32.totalorder %s111, %s112
      %p126 = scmp.eq.s32.totalorder %s26, 1
      %p127 = por %p125, %p126
      %p129 = scmp.ne.s32.totalorder %s112, %s128
      %p130 = scmp.eq.s32.totalorder %s26, 0
      %p131 = por %p129, %p130
      %s132 = ssub.s32 %s20, %s27
      %p133 = scmp.eq.s32.totalorder %s132, 0
      %s135 = sadd.s32 %s134, 1
      %s136 = scalar_select %p133, %s134, %s135
      %p139 = pneg %p133
      %p140 = scmp.eq.s32.totalorder %s20, 1
      %p141 = por %p139, %p140
      %p142 = scmp.ne.s32.totalorder %s134, %s137
      %p143 = scmp.eq.s32.totalorder %s20, 0
      %p144 = por %p142, %p143
      %p145 = scmp.ne.s32.totalorder %s134, %s137
      %p146 = scmp.eq.s32.totalorder %s25, 1
      %p147 = por %p145, %p146
      %p148 = scmp.ne.s32.totalorder %s137, %s138
      %p149 = scmp.eq.s32.totalorder %s25, 0
      %p150 = por %p148, %p149
      %p151 = scmp.ne.s32.totalorder %s137, %s138
      %p152 = scmp.eq.s32.totalorder %s26, 1
      %p153 = por %p151, %p152
      %p155 = scmp.ne.s32.totalorder %s138, %s154
      %p156 = scmp.eq.s32.totalorder %s26, 0
      %p157 = por %p155, %p156
      %s159 = sadd.s32 %s158, 1
      %p162 = scmp.eq.s32.totalorder %s20, 1
      %p163 = scmp.ne.s32.totalorder %s158, %s160
      %p164 = scmp.eq.s32.totalorder %s20, 0
      %p165 = por %p163, %p164
      %p166 = scmp.ne.s32.totalorder %s158, %s160
      %p167 = scmp.eq.s32.totalorder %s25, 1
      %p168 = por %p166, %p167
      %p169 = scmp.ne.s32.totalorder %s160, %s161
      %p170 = scmp.eq.s32.totalorder %s25, 0
      %p171 = por %p169, %p170
      %p172 = scmp.ne.s32.totalorder %s160, %s161
      %p173 = scmp.eq.s32.totalorder %s26, 1
      %p174 = por %p172, %p173
      %p176 = scmp.ne.s32.totalorder %s161, %s175
      %p177 = scmp.eq.s32.totalorder %s26, 0
      %p178 = por %p176, %p177
      %s180 = sadd.s32 %s179, 1
      %p183 = scmp.eq.s32.totalorder %s20, 1
      %p184 = scmp.ne.s32.totalorder %s179, %s181
      %p185 = scmp.eq.s32.totalorder %s20, 0
      %p186 = por %p184, %p185
      %p187 = scmp.ne.s32.totalorder %s179, %s181
      %p188 = scmp.eq.s32.totalorder %s25, 1
      %p189 = por %p187, %p188
      %p190 = scmp.ne.s32.totalorder %s181, %s182
      %p191 = scmp.eq.s32.totalorder %s25, 0
      %p192 = por %p190, %p191
      %p193 = scmp.ne.s32.totalorder %s181, %s182
      %p194 = scmp.eq.s32.totalorder %s26, 1
      %p195 = por %p193, %p194
      %p197 = scmp.ne.s32.totalorder %s182, %s196
      %p198 = scmp.eq.s32.totalorder %s26, 0
      %p199 = por %p197, %p198
      %s201 = sadd.s32 %s200, 1
      %p204 = scmp.eq.s32.totalorder %s20, 1
      %p205 = scmp.ne.s32.totalorder %s200, %s202
      %p206 = scmp.eq.s32.totalorder %s20, 0
      %p207 = por %p205, %p206
      %p208 = scmp.ne.s32.totalorder %s200, %s202
      %p209 = scmp.eq.s32.totalorder %s25, 1
      %p210 = por %p208, %p209
      %p211 = scmp.ne.s32.totalorder %s202, %s203
      %p212 = scmp.eq.s32.totalorder %s25, 0
      %p213 = por %p211, %p212
      %p214 = scmp.ne.s32.totalorder %s202, %s203
      %p215 = scmp.eq.s32.totalorder %s26, 1
      %p216 = por %p214, %p215
      %p218 = scmp.ne.s32.totalorder %s203, %s217
      %p219 = scmp.eq.s32.totalorder %s26, 0
      %p220 = por %p218, %p219
      %s222 = sadd.s32 %s221, 1
      %p225 = scmp.eq.s32.totalorder %s20, 1
      %p226 = scmp.ne.s32.totalorder %s221, %s223
      %p227 = scmp.eq.s32.totalorder %s20, 0
      %p228 = por %p226, %p227
      %p229 = scmp.ne.s32.totalorder %s221, %s223
      %p230 = scmp.eq.s32.totalorder %s25, 1
      %p231 = por %p229, %p230
      %p232 = scmp.ne.s32.totalorder %s223, %s224
      %p233 = scmp.eq.s32.totalorder %s25, 0
      %p234 = por %p232, %p233
      %p235 = scmp.ne.s32.totalorder %s223, %s224
      %p236 = scmp.eq.s32.totalorder %s26, 1
      %p237 = por %p235, %p236
      %p239 = scmp.ne.s32.totalorder %s224, %s238
      %p240 = scmp.eq.s32.totalorder %s26, 0
      %p241 = por %p239, %p240
      %s242 = ssub.s32 %s20, %s27
      %p243 = scmp.eq.s32.totalorder %s242, 0
      %s245 = sadd.s32 %s244, 1
      %s246 = scalar_select %p243, %s244, %s245
      %p249 = pneg %p243
      %p250 = scmp.eq.s32.totalorder %s20, 1
      %p251 = por %p249, %p250
      %p252 = scmp.ne.s32.totalorder %s244, %s247
      %p253 = scmp.eq.s32.totalorder %s20, 0
      %p254 = por %p252, %p253
      %p255 = scmp.ne.s32.totalorder %s244, %s247
      %p256 = scmp.eq.s32.totalorder %s25, 1
      %p257 = por %p255, %p256
      %p258 = scmp.ne.s32.totalorder %s247, %s248
      %p259 = scmp.eq.s32.totalorder %s25, 0
      %p260 = por %p258, %p259
      %p261 = scmp.ne.s32.totalorder %s247, %s248
      %p262 = scmp.eq.s32.totalorder %s26, 1
      %p263 = por %p261, %p262
      %p265 = scmp.ne.s32.totalorder %s248, %s264
      %p266 = scmp.eq.s32.totalorder %s26, 0
      %p267 = por %p265, %p266
      %p268 = scmp.le.s32.totalorder 1, %s20
      %p269 = scmp.lt.s32.totalorder %s20, 3
      %p270 = pnand %p268, %p269
      %p271 = pneg %p270
      // Predicated region
      $region9: #{tpu_custom_call.1} parent=5 // pred_check
        _
      $region10: #{tpu_custom_call.1} parent=5 // pred_check_branch
        %273 = sbr.rel (%p270) target = $region12
      $region11: #{tpu_custom_call.1} parent=5 // pred_region
        %s274 = ssub.s32 %s20, 1
        // Predicated region
        $region13: #{tpu_custom_call.1} parent=11 // pred_check
          %p275 = pneg %p171
        $region14: #{tpu_custom_call.1} parent=11 // pred_check_branch
          %277 = sbr.rel (%p275) target = $region16
        $region15: #{tpu_custom_call.1} parent=11 // pred_region
          _
        $region16: #{tpu_custom_call.1} parent=11 // pred_fallthru
          _
        // Predicated region
        $region17: #{tpu_custom_call.1} parent=11 // pred_check
          %p278 = pneg %p192
        $region18: #{tpu_custom_call.1} parent=11 // pred_check_branch
          %280 = sbr.rel (%p278) target = $region20
        $region19: #{tpu_custom_call.1} parent=11 // pred_region
          _
        $region20: #{tpu_custom_call.1} parent=11 // pred_fallthru
          _
        // Predicated region
        $region21: #{tpu_custom_call.1} parent=11 // pred_check
          %p281 = pneg %p213
        $region22: #{tpu_custom_call.1} parent=11 // pred_check_branch
          %283 = sbr.rel (%p281) target = $region24
        $region23: #{tpu_custom_call.1} parent=11 // pred_region
          _
        $region24: #{tpu_custom_call.1} parent=11 // pred_fallthru
          _
        // Predicated region
        $region25: #{tpu_custom_call.1} parent=11 // pred_check
          %p284 = pneg %p234
        $region26: #{tpu_custom_call.1} parent=11 // pred_check_branch
          %286 = sbr.rel (%p284) target = $region28
        $region27: #{tpu_custom_call.1} parent=11 // pred_region
          _
        $region28: #{tpu_custom_call.1} parent=11 // pred_fallthru
          _
      $region12: #{tpu_custom_call.1} parent=5 // pred_fallthru
        _
      %p287 = scmp.lt.s32.totalorder %s20, 2
      // Predicated region
      $region29: #{tpu_custom_call.1} parent=5 // pred_check
        %p288 = pneg %p287
      $region30: #{tpu_custom_call.1} parent=5 // pred_check_branch
        %290 = sbr.rel (%p288) target = $region32
      $region31: #{tpu_custom_call.1} parent=5 // pred_region
        // Predicated region
        $region33: #{tpu_custom_call.1} parent=31 // pred_check
          %p291 = pneg %p40
        $region34: #{tpu_custom_call.1} parent=31 // pred_check_branch
          %293 = sbr.rel (%p291) target = $region36
        $region35: #{tpu_custom_call.1} parent=31 // pred_region
          %p294 = scmp.lt.s32.totalorder %s20, 1
          %s295 = scalar_select %p294, %s20, 1
          %s296 = smul.addr %s295, 4
          %s297 = smul.addr %s296, 8
          %s298 = scalar_lea.vmem %s0, %s297
        $region36: #{tpu_custom_call.1} parent=31 // pred_fallthru
          _
        // Predicated region
        $region37: #{tpu_custom_call.1} parent=31 // pred_check
          %p299 = pneg %p66
        $region38: #{tpu_custom_call.1} parent=31 // pred_check_branch
          %301 = sbr.rel (%p299) target = $region40
        $region39: #{tpu_custom_call.1} parent=31 // pred_region
          %p302 = scmp.lt.s32.totalorder %s20, 1
          %s303 = scalar_select %p302, %s20, 1
          %s304 = smul.addr %s303, 4
          %s305 = smul.addr %s304, 8
          %s306 = scalar_lea.vmem %s1, %s305
        $region40: #{tpu_custom_call.1} parent=31 // pred_fallthru
          _
        // Predicated region
        $region41: #{tpu_custom_call.1} parent=31 // pred_check
          %p307 = pneg %p92
        $region42: #{tpu_custom_call.1} parent=31 // pred_check_branch
          %309 = sbr.rel (%p307) target = $region44
        $region43: #{tpu_custom_call.1} parent=31 // pred_region
          %p310 = scmp.lt.s32.totalorder %s20, 1
          %s311 = scalar_select %p310, %s20, 1
          %s312 = smul.addr %s311, 16
          %s313 = smul.addr %s312, 8
          %s314 = scalar_lea.vmem %s2, %s313
        $region44: #{tpu_custom_call.1} parent=31 // pred_fallthru
          _
        // Predicated region
        $region45: #{tpu_custom_call.1} parent=31 // pred_check
          %p315 = pneg %p118
        $region46: #{tpu_custom_call.1} parent=31 // pred_check_branch
          %317 = sbr.rel (%p315) target = $region48
        $region47: #{tpu_custom_call.1} parent=31 // pred_region
          %p318 = scmp.lt.s32.totalorder %s20, 1
          %s319 = scalar_select %p318, %s20, 1
          %s320 = scalar_lea.vmem %s3, %s319
        $region48: #{tpu_custom_call.1} parent=31 // pred_fallthru
          _
        // Predicated region
        $region49: #{tpu_custom_call.1} parent=31 // pred_check
          %p321 = pneg %p144
        $region50: #{tpu_custom_call.1} parent=31 // pred_check_branch
          %323 = sbr.rel (%p321) target = $region52
        $region51: #{tpu_custom_call.1} parent=31 // pred_region
          %p324 = scmp.lt.s32.totalorder %s20, 1
          %s325 = scalar_select %p324, %s20, 1
          %s326 = smul.addr %s325, 16
          %s327 = smul.addr %s326, 8
          %s328 = scalar_lea.vmem %s4, %s327
        $region52: #{tpu_custom_call.1} parent=31 // pred_fallthru
          _
      $region32: #{tpu_custom_call.1} parent=5 // pred_fallthru
        _
      %p329 = scmp.le.s32.totalorder 1, %s20
      %p330 = scmp.lt.s32.totalorder %s20, 3
      %p331 = pnand %p329, %p330
      %p332 = pneg %p331
      // Predicated region
      $region53: #{tpu_custom_call.1} parent=5 // pred_check
        _
      $region54: #{tpu_custom_call.1} parent=5 // pred_check_branch
        %334 = sbr.rel (%p331) target = $region56
      $region55: #{tpu_custom_call.1} parent=5 // pred_region
        %s335 = ssub.s32 %s20, 1
        %p336 = scmp.lt.s32.totalorder %s25, 1
        %s337 = scalar_select %p336, %s25, 1
        %s338 = smul.addr %s337, 4
        %s339 = smul.addr %s338, 8
        %s340 = scalar_lea.vmem %s0, %s339
        %p341 = pneg %p46
        %p342 = pneg %p43
        %p343 = scmp.lt.s32.totalorder %s25, 1
        %s344 = scalar_select %p343, %s25, 1
        %s345 = smul.addr %s344, 4
        %s346 = smul.addr %s345, 8
        %s347 = scalar_lea.vmem %s1, %s346
        %p348 = pneg %p72
        %p349 = pneg %p69
        %p350 = scmp.lt.s32.totalorder %s25, 1
        %s351 = scalar_select %p350, %s25, 1
        %s352 = smul.addr %s351, 16
        %s353 = smul.addr %s352, 8
        %s354 = scalar_lea.vmem %s2, %s353
        %p355 = pneg %p98
        %p356 = pneg %p95
        %p357 = scmp.lt.s32.totalorder %s25, 1
        %s358 = scalar_select %p357, %s25, 1
        %s359 = scalar_lea.vmem %s3, %s358
        %p360 = pneg %p124
        %p361 = pneg %p121
        %p362 = scmp.lt.s32.totalorder %s25, 1
        %s363 = scalar_select %p362, %s25, 1
        %s364 = smul.addr %s363, 16
        %s365 = smul.addr %s364, 8
        %s366 = scalar_lea.vmem %s4, %s365
        %p367 = pneg %p150
        %p368 = pneg %p147
        %p369 = pneg %p171
        %p370 = pneg %p168
        %p371 = pneg %p192
        %p372 = pneg %p189
        %p373 = pneg %p213
        %p374 = pneg %p210
        %p375 = pneg %p234
        %p376 = pneg %p231
        %p377 = pneg %p260
        %p378 = pneg %p257
        %s379 = sand.u32 %s247, 1
        %s380 = scalar_lea.sflag [#allocation4], %s379
        %s381 = sand.u32 %s247, 1
        %s382 = smul.addr %s381, 128
        %s383 = scalar_lea.vmem [#allocation3], %s382
        %p384 = scmp.lt.s32.totalorder %s25, 1
        %s385 = scalar_select %p384, %s25, 1
        %s386 = smul.addr %s385, 4
        %s387 = smul.addr %s386, 8
        %s388 = scalar_lea.vmem %s0, %s387
        %p389 = scmp.lt.s32.totalorder %s25, 1
        %s390 = scalar_select %p389, %s25, 1
        %s391 = smul.addr %s390, 4
        %s392 = smul.addr %s391, 8
        %s393 = scalar_lea.vmem %s1, %s392
        %p394 = scmp.lt.s32.totalorder %s25, 1
        %s395 = scalar_select %p394, %s25, 1
        %s396 = smul.addr %s395, 16
        %s397 = smul.addr %s396, 8
        %s398 = scalar_lea.vmem %s2, %s397
        %p399 = scmp.lt.s32.totalorder %s25, 1
        %s400 = scalar_select %p399, %s25, 1
        %s401 = scalar_lea.vmem %s3, %s400
        %p402 = scmp.lt.s32.totalorder %s25, 1
        %s403 = scalar_select %p402, %s25, 1
        %s404 = smul.addr %s403, 16
        %s405 = smul.addr %s404, 8
        %s406 = scalar_lea.vmem %s4, %s405
        %v408 = vld [vmem:[%s388] sm:$0xff]
        %v409 = vld [vmem:[%s388 + $0x8] sm:$0xff]
        %v410 = vld [vmem:[%s388 + $0x10] sm:$0xff]
        %v411 = vld [vmem:[%s388 + $0x18] sm:$0xff]
        %v412 = vld [vmem:[%s393] sm:$0xff]
        %v413 = vld [vmem:[%s393 + $0x8] sm:$0xff]
        %v414 = vld [vmem:[%s393 + $0x10] sm:$0xff]
        %v415 = vld [vmem:[%s393 + $0x18] sm:$0xff]
        %v416 = vld [vmem:[%s398] sm:$0xff]
        %v417 = vld [vmem:[%s398 + $0x8] sm:$0xff]
        %v418 = vld [vmem:[%s398 + $0x10] sm:$0xff]
        %v419 = vld [vmem:[%s398 + $0x18] sm:$0xff]
        %v420 = vld [vmem:[%s398 + $0x20] sm:$0xff]
        %v421 = vld [vmem:[%s398 + $0x28] sm:$0xff]
        %v422 = vld [vmem:[%s398 + $0x30] sm:$0xff]
        %v423 = vld [vmem:[%s398 + $0x38] sm:$0xff]
        %v424 = vld [vmem:[%s398 + $0x40] sm:$0xff]
        %v425 = vld [vmem:[%s398 + $0x48] sm:$0xff]
        %v426 = vld [vmem:[%s398 + $0x50] sm:$0xff]
        %v427 = vld [vmem:[%s398 + $0x58] sm:$0xff]
        %v428 = vld [vmem:[%s398 + $0x60] sm:$0xff]
        %v429 = vld [vmem:[%s398 + $0x68] sm:$0xff]
        %v430 = vld [vmem:[%s398 + $0x70] sm:$0xff]
        %v431 = vld [vmem:[%s398 + $0x78] sm:$0xff]
        %v432 = vld [vmem:[%s401] sm:$0x1]
        %v433 = vld [vmem:[%s406] sm:$0xff]
        %v434 = vld [vmem:[%s406 + $0x8] sm:$0xff]
        %v435 = vld [vmem:[%s406 + $0x10] sm:$0xff]
        %v436 = vld [vmem:[%s406 + $0x18] sm:$0xff]
        %v437 = vld [vmem:[%s406 + $0x20] sm:$0xff]
        %v438 = vld [vmem:[%s406 + $0x28] sm:$0xff]
        %v439 = vld [vmem:[%s406 + $0x30] sm:$0xff]
        %v440 = vld [vmem:[%s406 + $0x38] sm:$0xff]
        %v441 = vld [vmem:[%s406 + $0x40] sm:$0xff]
        %v442 = vld [vmem:[%s406 + $0x48] sm:$0xff]
        %v443 = vld [vmem:[%s406 + $0x50] sm:$0xff]
        %v444 = vld [vmem:[%s406 + $0x58] sm:$0xff]
        %v445 = vld [vmem:[%s406 + $0x60] sm:$0xff]
        %v446 = vld [vmem:[%s406 + $0x68] sm:$0xff]
        %v447 = vld [vmem:[%s406 + $0x70] sm:$0xff]
        %v448 = vld [vmem:[%s406 + $0x78] sm:$0xff]
        %v449 = vld [vmem:[%s5] sm:$0xff]
        %v450 = vld [vmem:[%s5 + $0x8] sm:$0xff]
        %v451 = vld [vmem:[%s5 + $0x10] sm:$0xff]
        %v452 = vld [vmem:[%s5 + $0x18] sm:$0xff]
        %v453 = vld [vmem:[%s6] sm:$0x1]
        %v454 = vld [vmem:[%s7] sm:$0x1]
        %v455 = vld [vmem:[#allocation2] sm:$0x1]
        %v456 = vpack.c.bf16 %v409, %v408
        %v457 = vpack.c.bf16 %v411, %v410
        %v458 = vpack.c.bf16 %v413, %v412
        %v459 = vpack.c.bf16 %v415, %v414
        %461 = vset.pattern.permute.xlu0 0
        %462 = vperm.xlu0 %461, %v449
        %v463 = vpop.permute.xlu0 %462
        %466 = vset.pattern.permute.xlu0 0
        %467 = vperm.xlu0 %466, %v450
        %v468 = vpop.permute.xlu0 %467
        %471 = vset.pattern.permute.xlu0 0
        %472 = vperm.xlu0 %471, %v451
        %v473 = vpop.permute.xlu0 %472
        %476 = vset.pattern.permute.xlu0 0
        %477 = vperm.xlu0 %476, %v452
        %v478 = vpop.permute.xlu0 %477
        %v480 = vmul.f32 %v408, %v463
        %v481 = vmul.f32 %v409, %v468
        %v482 = vmul.f32 %v410, %v473
        %v483 = vmul.f32 %v411, %v478
        %v484 = vadd.f32 %v480, %v481
        %v485 = vadd.f32 %v484, %v482
        %v486 = vadd.f32 %v485, %v483
        %v487 = vrot.slane %v486, 4
        %v488 = vadd.f32 %v486, %v487
        %v489 = vrot.slane %v488, 2
        %v490 = vadd.f32 %v488, %v489
        %v491 = vrot.slane %v490, 1
        %v492 = vadd.f32 %v490, %v491
        %v494 = vperm.slane %v453, 0
        %v496 = vmul.f32 %v416, %v494
        %v497 = vmul.f32 %v417, %v494
        %v498 = vmul.f32 %v418, %v494
        %v499 = vmul.f32 %v419, %v494
        %v500 = vmul.f32 %v420, %v494
        %v501 = vmul.f32 %v421, %v494
        %v502 = vmul.f32 %v422, %v494
        %v503 = vmul.f32 %v423, %v494
        %v504 = vmul.f32 %v424, %v494
        %v505 = vmul.f32 %v425, %v494
        %v506 = vmul.f32 %v426, %v494
        %v507 = vmul.f32 %v427, %v494
        %v508 = vmul.f32 %v428, %v494
        %v509 = vmul.f32 %v429, %v494
        %v510 = vmul.f32 %v430, %v494
        %v511 = vmul.f32 %v431, %v494
        %vm512 = vcmask 261120
        %v513 = vsel %vm512, %v496, 0.0
        %514 = vadd.xlane.f32.xlu0 %v513
        %v515 = vpop.xlane.xlu0 %514
        %v516 = vsel %vm512, %v497, 0.0
        %517 = vadd.xlane.f32.xlu0 %v516
        %v518 = vpop.xlane.xlu0 %517
        %v519 = vsel %vm512, %v498, 0.0
        %520 = vadd.xlane.f32.xlu0 %v519
        %v521 = vpop.xlane.xlu0 %520
        %v522 = vsel %vm512, %v499, 0.0
        %523 = vadd.xlane.f32.xlu0 %v522
        %v524 = vpop.xlane.xlu0 %523
        %v525 = vsel %vm512, %v500, 0.0
        %526 = vadd.xlane.f32.xlu0 %v525
        %v527 = vpop.xlane.xlu0 %526
        %v528 = vsel %vm512, %v501, 0.0
        %529 = vadd.xlane.f32.xlu0 %v528
        %v530 = vpop.xlane.xlu0 %529
        %v531 = vsel %vm512, %v502, 0.0
        %532 = vadd.xlane.f32.xlu0 %v531
        %v533 = vpop.xlane.xlu0 %532
        %v534 = vsel %vm512, %v503, 0.0
        %535 = vadd.xlane.f32.xlu0 %v534
        %v536 = vpop.xlane.xlu0 %535
        %v537 = vsel %vm512, %v504, 0.0
        %538 = vadd.xlane.f32.xlu0 %v537
        %v539 = vpop.xlane.xlu0 %538
        %v540 = vsel %vm512, %v505, 0.0
        %541 = vadd.xlane.f32.xlu0 %v540
        %v542 = vpop.xlane.xlu0 %541
        %v543 = vsel %vm512, %v506, 0.0
        %544 = vadd.xlane.f32.xlu0 %v543
        %v545 = vpop.xlane.xlu0 %544
        %v546 = vsel %vm512, %v507, 0.0
        %547 = vadd.xlane.f32.xlu0 %v546
        %v548 = vpop.xlane.xlu0 %547
        %v549 = vsel %vm512, %v508, 0.0
        %550 = vadd.xlane.f32.xlu0 %v549
        %v551 = vpop.xlane.xlu0 %550
        %v552 = vsel %vm512, %v509, 0.0
        %553 = vadd.xlane.f32.xlu0 %v552
        %v554 = vpop.xlane.xlu0 %553
        %v555 = vsel %vm512, %v510, 0.0
        %556 = vadd.xlane.f32.xlu0 %v555
        %v557 = vpop.xlane.xlu0 %556
        %v558 = vsel %vm512, %v511, 0.0
        %559 = vadd.xlane.f32.xlu0 %v558
        %v560 = vpop.xlane.xlu0 %559
        %v562 = vperm.slane %v454, 0
        %v564 = vmul.f32 %v416, %v562
        %v565 = vmul.f32 %v417, %v562
        %v566 = vmul.f32 %v418, %v562
        %v567 = vmul.f32 %v419, %v562
        %v568 = vmul.f32 %v420, %v562
        %v569 = vmul.f32 %v421, %v562
        %v570 = vmul.f32 %v422, %v562
        %v571 = vmul.f32 %v423, %v562
        %v572 = vmul.f32 %v424, %v562
        %v573 = vmul.f32 %v425, %v562
        %v574 = vmul.f32 %v426, %v562
        %v575 = vmul.f32 %v427, %v562
        %v576 = vmul.f32 %v428, %v562
        %v577 = vmul.f32 %v429, %v562
        %v578 = vmul.f32 %v430, %v562
        %v579 = vmul.f32 %v431, %v562
        %v580 = vpack.c.bf16 %v565, %v564
        %v581 = vpack.c.bf16 %v567, %v566
        %v582 = vpack.c.bf16 %v569, %v568
        %v583 = vpack.c.bf16 %v571, %v570
        %v584 = vpack.c.bf16 %v573, %v572
        %v585 = vpack.c.bf16 %v575, %v574
        %v586 = vpack.c.bf16 %v577, %v576
        %v587 = vpack.c.bf16 %v579, %v578
        %v589 = vsel %vm512, %v580, 0
        %v592 = vsel %vm512, %v581, 0
        %v595 = vsel %vm512, %v582, 0
        %v598 = vsel %vm512, %v583, 0
        %v601 = vsel %vm512, %v584, 0
        %v604 = vsel %vm512, %v585, 0
        %v607 = vsel %vm512, %v586, 0
        %v610 = vsel %vm512, %v587, 0
        %612 = vmatpush.bf16.msra.mxu0 0
        %613 = vmatpush.bf16.msra.mxu0 0
        %614 = vmatpush.bf16.msra.mxu0 0
        %615 = vmatpush.bf16.msra.mxu0 0
        %616 = vmatpush.bf16.msra.mxu0 0
        %617 = vmatpush.bf16.msra.mxu0 0
        %618 = vmatpush.bf16.msra.mxu0 %v457
        %619 = vmatpush.bf16.msra.mxu0 %v456
        %620 = vmatmul.bf16.gmra.mxu0 %v589
        %v621 = vpop.f32.mrf.mxu0
        %v622 = vadd.f32 %v492, %v621
        %v623 = vpop.f32.mrf.mxu0
        %v624 = vadd.f32 %v492, %v623
        %625 = vmatmul.bf16.gmra.mxu0 %v592
        %v626 = vpop.f32.mrf.mxu0
        %v627 = vadd.f32 %v492, %v626
        %v628 = vpop.f32.mrf.mxu0
        %v629 = vadd.f32 %v492, %v628
        %630 = vmatmul.bf16.gmra.mxu0 %v595
        %v631 = vpop.f32.mrf.mxu0
        %v632 = vadd.f32 %v492, %v631
        %v633 = vpop.f32.mrf.mxu0
        %v634 = vadd.f32 %v492, %v633
        %635 = vmatmul.bf16.gmra.mxu0 %v598
        %v636 = vpop.f32.mrf.mxu0
        %v637 = vadd.f32 %v492, %v636
        %v638 = vpop.f32.mrf.mxu0
        %v639 = vadd.f32 %v492, %v638
        %640 = vmatmul.bf16.gmra.mxu0 %v601
        %v641 = vpop.f32.mrf.mxu0
        %v642 = vadd.f32 %v492, %v641
        %v643 = vpop.f32.mrf.mxu0
        %v644 = vadd.f32 %v492, %v643
        %645 = vmatmul.bf16.gmra.mxu0 %v604
        %v646 = vpop.f32.mrf.mxu0
        %v647 = vadd.f32 %v492, %v646
        %v648 = vpop.f32.mrf.mxu0
        %v649 = vadd.f32 %v492, %v648
        %650 = vmatmul.bf16.gmra.mxu0 %v607
        %v651 = vpop.f32.mrf.mxu0
        %v652 = vadd.f32 %v492, %v651
        %v653 = vpop.f32.mrf.mxu0
        %v654 = vadd.f32 %v492, %v653
        %655 = vmatmul.bf16.gmra.mxu0 %v610
        %v656 = vpop.f32.mrf.mxu0
        %v657 = vadd.f32 %v492, %v656
        %v658 = vpop.f32.mrf.mxu0
        %v659 = vadd.f32 %v492, %v658
        %660 = vdwg.mxu0
        %v661 = vadd.f32 %v622, %v515
        %v662 = vadd.f32 %v624, %v518
        %v663 = vadd.f32 %v627, %v521
        %v664 = vadd.f32 %v629, %v524
        %v665 = vadd.f32 %v632, %v527
        %v666 = vadd.f32 %v634, %v530
        %v667 = vadd.f32 %v637, %v533
        %v668 = vadd.f32 %v639, %v536
        %v669 = vadd.f32 %v642, %v539
        %v670 = vadd.f32 %v644, %v542
        %v671 = vadd.f32 %v647, %v545
        %v672 = vadd.f32 %v649, %v548
        %v673 = vadd.f32 %v652, %v551
        %v674 = vadd.f32 %v654, %v554
        %v675 = vadd.f32 %v657, %v557
        %v676 = vadd.f32 %v659, %v560
        %v678 = vperm.slane %v455, 0
        %679 = vset.pattern.permute.xlu0 0
        %680 = vperm.xlu0 %679, %v678
        %v681 = vpop.permute.xlu0 %680
        %v683 = vadd.f32 %v661, %v681
        %v684 = vadd.f32 %v662, %v681
        %v685 = vadd.f32 %v663, %v681
        %v686 = vadd.f32 %v664, %v681
        %v687 = vadd.f32 %v665, %v681
        %v688 = vadd.f32 %v666, %v681
        %v689 = vadd.f32 %v667, %v681
        %v690 = vadd.f32 %v668, %v681
        %v691 = vadd.f32 %v669, %v681
        %v692 = vadd.f32 %v670, %v681
        %v693 = vadd.f32 %v671, %v681
        %v694 = vadd.f32 %v672, %v681
        %v695 = vadd.f32 %v673, %v681
        %v696 = vadd.f32 %v674, %v681
        %v697 = vadd.f32 %v675, %v681
        %v698 = vadd.f32 %v676, %v681
        %v699 = vsub.f32 1.0, %v433
        %v700 = vsub.f32 1.0, %v434
        %v701 = vsub.f32 1.0, %v435
        %v702 = vsub.f32 1.0, %v436
        %v703 = vsub.f32 1.0, %v437
        %v704 = vsub.f32 1.0, %v438
        %v705 = vsub.f32 1.0, %v439
        %v706 = vsub.f32 1.0, %v440
        %v707 = vsub.f32 1.0, %v441
        %v708 = vsub.f32 1.0, %v442
        %v709 = vsub.f32 1.0, %v443
        %v710 = vsub.f32 1.0, %v444
        %v711 = vsub.f32 1.0, %v445
        %v712 = vsub.f32 1.0, %v446
        %v713 = vsub.f32 1.0, %v447
        %v714 = vsub.f32 1.0, %v448
        %v715 = vmul.f32 %v699, -1e+30
        %v716 = vmul.f32 %v700, -1e+30
        %v717 = vmul.f32 %v701, -1e+30
        %v718 = vmul.f32 %v702, -1e+30
        %v719 = vmul.f32 %v703, -1e+30
        %v720 = vmul.f32 %v704, -1e+30
        %v721 = vmul.f32 %v705, -1e+30
        %v722 = vmul.f32 %v706, -1e+30
        %v723 = vmul.f32 %v707, -1e+30
        %v724 = vmul.f32 %v708, -1e+30
        %v725 = vmul.f32 %v709, -1e+30
        %v726 = vmul.f32 %v710, -1e+30
        %v727 = vmul.f32 %v711, -1e+30
        %v728 = vmul.f32 %v712, -1e+30
        %v729 = vmul.f32 %v713, -1e+30
        %v730 = vmul.f32 %v714, -1e+30
        %732 = vset.pattern.permute.xlu0 0
        %733 = vperm.xlu0 %732, %v715
        %v734 = vpop.permute.xlu0 %733
        %737 = vset.pattern.permute.xlu0 0
        %738 = vperm.xlu0 %737, %v716
        %v739 = vpop.permute.xlu0 %738
        %742 = vset.pattern.permute.xlu0 0
        %743 = vperm.xlu0 %742, %v717
        %v744 = vpop.permute.xlu0 %743
        %747 = vset.pattern.permute.xlu0 0
        %748 = vperm.xlu0 %747, %v718
        %v749 = vpop.permute.xlu0 %748
        %752 = vset.pattern.permute.xlu0 0
        %753 = vperm.xlu0 %752, %v719
        %v754 = vpop.permute.xlu0 %753
        %757 = vset.pattern.permute.xlu0 0
        %758 = vperm.xlu0 %757, %v720
        %v759 = vpop.permute.xlu0 %758
        %762 = vset.pattern.permute.xlu0 0
        %763 = vperm.xlu0 %762, %v721
        %v764 = vpop.permute.xlu0 %763
        %767 = vset.pattern.permute.xlu0 0
        %768 = vperm.xlu0 %767, %v722
        %v769 = vpop.permute.xlu0 %768
        %772 = vset.pattern.permute.xlu0 0
        %773 = vperm.xlu0 %772, %v723
        %v774 = vpop.permute.xlu0 %773
        %777 = vset.pattern.permute.xlu0 0
        %778 = vperm.xlu0 %777, %v724
        %v779 = vpop.permute.xlu0 %778
        %782 = vset.pattern.permute.xlu0 0
        %783 = vperm.xlu0 %782, %v725
        %v784 = vpop.permute.xlu0 %783
        %787 = vset.pattern.permute.xlu0 0
        %788 = vperm.xlu0 %787, %v726
        %v789 = vpop.permute.xlu0 %788
        %792 = vset.pattern.permute.xlu0 0
        %793 = vperm.xlu0 %792, %v727
        %v794 = vpop.permute.xlu0 %793
        %797 = vset.pattern.permute.xlu0 0
        %798 = vperm.xlu0 %797, %v728
        %v799 = vpop.permute.xlu0 %798
        %802 = vset.pattern.permute.xlu0 0
        %803 = vperm.xlu0 %802, %v729
        %v804 = vpop.permute.xlu0 %803
        %807 = vset.pattern.permute.xlu0 0
        %808 = vperm.xlu0 %807, %v730
        %v809 = vpop.permute.xlu0 %808
        %v811 = vadd.f32 %v683, %v734
        %v812 = vadd.f32 %v684, %v739
        %v813 = vadd.f32 %v685, %v744
        %v814 = vadd.f32 %v686, %v749
        %v815 = vadd.f32 %v687, %v754
        %v816 = vadd.f32 %v688, %v759
        %v817 = vadd.f32 %v689, %v764
        %v818 = vadd.f32 %v690, %v769
        %v819 = vadd.f32 %v691, %v774
        %v820 = vadd.f32 %v692, %v779
        %v821 = vadd.f32 %v693, %v784
        %v822 = vadd.f32 %v694, %v789
        %v823 = vadd.f32 %v695, %v794
        %v824 = vadd.f32 %v696, %v799
        %v825 = vadd.f32 %v697, %v804
        %v826 = vadd.f32 %v698, %v809
        %v827 = vmax.f32 %v811, %v815
        %v828 = vmax.f32 %v812, %v816
        %v829 = vmax.f32 %v813, %v817
        %v830 = vmax.f32 %v814, %v818
        %v831 = vmax.f32 %v827, %v819
        %v832 = vmax.f32 %v828, %v820
        %v833 = vmax.f32 %v829, %v821
        %v834 = vmax.f32 %v830, %v822
        %v835 = vmax.f32 %v831, %v823
        %v836 = vmax.f32 %v832, %v824
        %v837 = vmax.f32 %v833, %v825
        %v838 = vmax.f32 %v834, %v826
        %v839 = vmax.f32 %v835, %v836
        %v840 = vmax.f32 %v837, %v838
        %v841 = vmax.f32 %v839, %v840
        %v842 = vrot.slane %v841, 4
        %v843 = vmax.f32 %v841, %v842
        %v844 = vrot.slane %v843, 2
        %v845 = vmax.f32 %v843, %v844
        %v846 = vrot.slane %v845, 1
        %v847 = vmax.f32 %v845, %v846
        %v848 = vsub.f32 %v811, %v847
        %v849 = vsub.f32 %v812, %v847
        %v850 = vsub.f32 %v813, %v847
        %v851 = vsub.f32 %v814, %v847
        %v852 = vsub.f32 %v815, %v847
        %v853 = vsub.f32 %v816, %v847
        %v854 = vsub.f32 %v817, %v847
        %v855 = vsub.f32 %v818, %v847
        %v856 = vsub.f32 %v819, %v847
        %v857 = vsub.f32 %v820, %v847
        %v858 = vsub.f32 %v821, %v847
        %v859 = vsub.f32 %v822, %v847
        %v860 = vsub.f32 %v823, %v847
        %v861 = vsub.f32 %v824, %v847
        %v862 = vsub.f32 %v825, %v847
        %v863 = vsub.f32 %v826, %v847
        %v864 = vmul.f32 %v848, 1.442695
        %v865 = vpow.pop %v864
        %v866 = vmul.f32 %v849, 1.442695
        %v867 = vpow.pop %v866
        %v868 = vmul.f32 %v850, 1.442695
        %v869 = vpow.pop %v868
        %v870 = vmul.f32 %v851, 1.442695
        %v871 = vpow.pop %v870
        %v872 = vmul.f32 %v852, 1.442695
        %v873 = vpow.pop %v872
        %v874 = vmul.f32 %v853, 1.442695
        %v875 = vpow.pop %v874
        %v876 = vmul.f32 %v854, 1.442695
        %v877 = vpow.pop %v876
        %v878 = vmul.f32 %v855, 1.442695
        %v879 = vpow.pop %v878
        %v880 = vmul.f32 %v856, 1.442695
        %v881 = vpow.pop %v880
        %v882 = vmul.f32 %v857, 1.442695
        %v883 = vpow.pop %v882
        %v884 = vmul.f32 %v858, 1.442695
        %v885 = vpow.pop %v884
        %v886 = vmul.f32 %v859, 1.442695
        %v887 = vpow.pop %v886
        %v888 = vmul.f32 %v860, 1.442695
        %v889 = vpow.pop %v888
        %v890 = vmul.f32 %v861, 1.442695
        %v891 = vpow.pop %v890
        %v892 = vmul.f32 %v862, 1.442695
        %v893 = vpow.pop %v892
        %v894 = vmul.f32 %v863, 1.442695
        %v895 = vpow.pop %v894
        %v896 = vadd.f32 %v865, %v867
        %v897 = vadd.f32 %v896, %v869
        %v898 = vadd.f32 %v897, %v871
        %v899 = vadd.f32 %v898, %v873
        %v900 = vadd.f32 %v899, %v875
        %v901 = vadd.f32 %v900, %v877
        %v902 = vadd.f32 %v901, %v879
        %v903 = vadd.f32 %v902, %v881
        %v904 = vadd.f32 %v903, %v883
        %v905 = vadd.f32 %v904, %v885
        %v906 = vadd.f32 %v905, %v887
        %v907 = vadd.f32 %v906, %v889
        %v908 = vadd.f32 %v907, %v891
        %v909 = vadd.f32 %v908, %v893
        %v910 = vadd.f32 %v909, %v895
        %v911 = vrot.slane %v910, 4
        %v912 = vadd.f32 %v910, %v911
        %v913 = vrot.slane %v912, 2
        %v914 = vadd.f32 %v912, %v913
        %v915 = vrot.slane %v914, 1
        %v916 = vadd.f32 %v914, %v915
        %v917 = vrcp.pop %v916
        %v918 = vmul.f32 %v865, %v917
        %v919 = vmul.f32 %v867, %v917
        %v920 = vmul.f32 %v869, %v917
        %v921 = vmul.f32 %v871, %v917
        %v922 = vmul.f32 %v873, %v917
        %v923 = vmul.f32 %v875, %v917
        %v924 = vmul.f32 %v877, %v917
        %v925 = vmul.f32 %v879, %v917
        %v926 = vmul.f32 %v881, %v917
        %v927 = vmul.f32 %v883, %v917
        %v928 = vmul.f32 %v885, %v917
        %v929 = vmul.f32 %v887, %v917
        %v930 = vmul.f32 %v889, %v917
        %v931 = vmul.f32 %v891, %v917
        %v932 = vmul.f32 %v893, %v917
        %v933 = vmul.f32 %v895, %v917
        %v934 = vsub.f32 1.0, %v432
        %v935 = vmul.f32 %v934, -1e+30
        %v937 = vperm.slane %v935, 0
        %v939 = vadd.f32 %v683, %v937
        %v940 = vadd.f32 %v684, %v937
        %v941 = vadd.f32 %v685, %v937
        %v942 = vadd.f32 %v686, %v937
        %v943 = vadd.f32 %v687, %v937
        %v944 = vadd.f32 %v688, %v937
        %v945 = vadd.f32 %v689, %v937
        %v946 = vadd.f32 %v690, %v937
        %v947 = vadd.f32 %v691, %v937
        %v948 = vadd.f32 %v692, %v937
        %v949 = vadd.f32 %v693, %v937
        %v950 = vadd.f32 %v694, %v937
        %v951 = vadd.f32 %v695, %v937
        %v952 = vadd.f32 %v696, %v937
        %v953 = vadd.f32 %v697, %v937
        %v954 = vadd.f32 %v698, %v937
        %955 = vmax.xlane.f32.xlu0 %v939
        %v956 = vpop.xlane.xlu0 %955
        %957 = vmax.xlane.f32.xlu0 %v940
        %v958 = vpop.xlane.xlu0 %957
        %959 = vmax.xlane.f32.xlu0 %v941
        %v960 = vpop.xlane.xlu0 %959
        %961 = vmax.xlane.f32.xlu0 %v942
        %v962 = vpop.xlane.xlu0 %961
        %963 = vmax.xlane.f32.xlu0 %v943
        %v964 = vpop.xlane.xlu0 %963
        %965 = vmax.xlane.f32.xlu0 %v944
        %v966 = vpop.xlane.xlu0 %965
        %967 = vmax.xlane.f32.xlu0 %v945
        %v968 = vpop.xlane.xlu0 %967
        %969 = vmax.xlane.f32.xlu0 %v946
        %v970 = vpop.xlane.xlu0 %969
        %971 = vmax.xlane.f32.xlu0 %v947
        %v972 = vpop.xlane.xlu0 %971
        %973 = vmax.xlane.f32.xlu0 %v948
        %v974 = vpop.xlane.xlu0 %973
        %975 = vmax.xlane.f32.xlu0 %v949
        %v976 = vpop.xlane.xlu0 %975
        %977 = vmax.xlane.f32.xlu0 %v950
        %v978 = vpop.xlane.xlu0 %977
        %979 = vmax.xlane.f32.xlu0 %v951
        %v980 = vpop.xlane.xlu0 %979
        %981 = vmax.xlane.f32.xlu0 %v952
        %v982 = vpop.xlane.xlu0 %981
        %983 = vmax.xlane.f32.xlu0 %v953
        %v984 = vpop.xlane.xlu0 %983
        %985 = vmax.xlane.f32.xlu0 %v954
        %v986 = vpop.xlane.xlu0 %985
        %v987 = vsub.f32 %v939, %v956
        %v988 = vsub.f32 %v940, %v958
        %v989 = vsub.f32 %v941, %v960
        %v990 = vsub.f32 %v942, %v962
        %v991 = vsub.f32 %v943, %v964
        %v992 = vsub.f32 %v944, %v966
        %v993 = vsub.f32 %v945, %v968
        %v994 = vsub.f32 %v946, %v970
        %v995 = vsub.f32 %v947, %v972
        %v996 = vsub.f32 %v948, %v974
        %v997 = vsub.f32 %v949, %v976
        %v998 = vsub.f32 %v950, %v978
        %v999 = vsub.f32 %v951, %v980
        %v1000 = vsub.f32 %v952, %v982
        %v1001 = vsub.f32 %v953, %v984
        %v1002 = vsub.f32 %v954, %v986
        %v1003 = vmul.f32 %v987, 1.442695
        %v1004 = vpow.pop %v1003
        %v1005 = vmul.f32 %v988, 1.442695
        %v1006 = vpow.pop %v1005
        %v1007 = vmul.f32 %v989, 1.442695
        %v1008 = vpow.pop %v1007
        %v1009 = vmul.f32 %v990, 1.442695
        %v1010 = vpow.pop %v1009
        %v1011 = vmul.f32 %v991, 1.442695
        %v1012 = vpow.pop %v1011
        %v1013 = vmul.f32 %v992, 1.442695
        %v1014 = vpow.pop %v1013
        %v1015 = vmul.f32 %v993, 1.442695
        %v1016 = vpow.pop %v1015
        %v1017 = vmul.f32 %v994, 1.442695
        %v1018 = vpow.pop %v1017
        %v1019 = vmul.f32 %v995, 1.442695
        %v1020 = vpow.pop %v1019
        %v1021 = vmul.f32 %v996, 1.442695
        %v1022 = vpow.pop %v1021
        %v1023 = vmul.f32 %v997, 1.442695
        %v1024 = vpow.pop %v1023
        %v1025 = vmul.f32 %v998, 1.442695
        %v1026 = vpow.pop %v1025
        %v1027 = vmul.f32 %v999, 1.442695
        %v1028 = vpow.pop %v1027
        %v1029 = vmul.f32 %v1000, 1.442695
        %v1030 = vpow.pop %v1029
        %v1031 = vmul.f32 %v1001, 1.442695
        %v1032 = vpow.pop %v1031
        %v1033 = vmul.f32 %v1002, 1.442695
        %v1034 = vpow.pop %v1033
        %1035 = vadd.xlane.f32.xlu0 %v1004
        %v1036 = vpop.xlane.xlu0 %1035
        %1037 = vadd.xlane.f32.xlu0 %v1006
        %v1038 = vpop.xlane.xlu0 %1037
        %1039 = vadd.xlane.f32.xlu0 %v1008
        %v1040 = vpop.xlane.xlu0 %1039
        %1041 = vadd.xlane.f32.xlu0 %v1010
        %v1042 = vpop.xlane.xlu0 %1041
        %1043 = vadd.xlane.f32.xlu0 %v1012
        %v1044 = vpop.xlane.xlu0 %1043
        %1045 = vadd.xlane.f32.xlu0 %v1014
        %v1046 = vpop.xlane.xlu0 %1045
        %1047 = vadd.xlane.f32.xlu0 %v1016
        %v1048 = vpop.xlane.xlu0 %1047
        %1049 = vadd.xlane.f32.xlu0 %v1018
        %v1050 = vpop.xlane.xlu0 %1049
        %1051 = vadd.xlane.f32.xlu0 %v1020
        %v1052 = vpop.xlane.xlu0 %1051
        %1053 = vadd.xlane.f32.xlu0 %v1022
        %v1054 = vpop.xlane.xlu0 %1053
        %1055 = vadd.xlane.f32.xlu0 %v1024
        %v1056 = vpop.xlane.xlu0 %1055
        %1057 = vadd.xlane.f32.xlu0 %v1026
        %v1058 = vpop.xlane.xlu0 %1057
        %1059 = vadd.xlane.f32.xlu0 %v1028
        %v1060 = vpop.xlane.xlu0 %1059
        %1061 = vadd.xlane.f32.xlu0 %v1030
        %v1062 = vpop.xlane.xlu0 %1061
        %1063 = vadd.xlane.f32.xlu0 %v1032
        %v1064 = vpop.xlane.xlu0 %1063
        %1065 = vadd.xlane.f32.xlu0 %v1034
        %v1066 = vpop.xlane.xlu0 %1065
        %v1067 = vrcp.pop %v1036
        %v1068 = vrcp.pop %v1038
        %v1069 = vrcp.pop %v1040
        %v1070 = vrcp.pop %v1042
        %v1071 = vrcp.pop %v1044
        %v1072 = vrcp.pop %v1046
        %v1073 = vrcp.pop %v1048
        %v1074 = vrcp.pop %v1050
        %v1075 = vrcp.pop %v1052
        %v1076 = vrcp.pop %v1054
        %v1077 = vrcp.pop %v1056
        %v1078 = vrcp.pop %v1058
        %v1079 = vrcp.pop %v1060
        %v1080 = vrcp.pop %v1062
        %v1081 = vrcp.pop %v1064
        %v1082 = vrcp.pop %v1066
        %v1083 = vmul.f32 %v1004, %v1067
        %v1084 = vmul.f32 %v1006, %v1068
        %v1085 = vmul.f32 %v1008, %v1069
        %v1086 = vmul.f32 %v1010, %v1070
        %v1087 = vmul.f32 %v1012, %v1071
        %v1088 = vmul.f32 %v1014, %v1072
        %v1089 = vmul.f32 %v1016, %v1073
        %v1090 = vmul.f32 %v1018, %v1074
        %v1091 = vmul.f32 %v1020, %v1075
        %v1092 = vmul.f32 %v1022, %v1076
        %v1093 = vmul.f32 %v1024, %v1077
        %v1094 = vmul.f32 %v1026, %v1078
        %v1095 = vmul.f32 %v1028, %v1079
        %v1096 = vmul.f32 %v1030, %v1080
        %v1097 = vmul.f32 %v1032, %v1081
        %v1098 = vmul.f32 %v1034, %v1082
        %v1099 = vpack.c.bf16 %v919, %v918
        %v1100 = vpack.c.bf16 %v921, %v920
        %v1101 = vpack.c.bf16 %v923, %v922
        %v1102 = vpack.c.bf16 %v925, %v924
        %v1103 = vpack.c.bf16 %v927, %v926
        %v1104 = vpack.c.bf16 %v929, %v928
        %v1105 = vpack.c.bf16 %v931, %v930
        %v1106 = vpack.c.bf16 %v933, %v932
        %v1107 = vpack.c.bf16 %v1084, %v1083
        %v1108 = vpack.c.bf16 %v1086, %v1085
        %v1109 = vpack.c.bf16 %v1088, %v1087
        %v1110 = vpack.c.bf16 %v1090, %v1089
        %v1111 = vpack.c.bf16 %v1092, %v1091
        %v1112 = vpack.c.bf16 %v1094, %v1093
        %v1113 = vpack.c.bf16 %v1096, %v1095
        %v1114 = vpack.c.bf16 %v1098, %v1097
        %1115 = vmatpush.bf16.msra.mxu0 %v1106
        %1116 = vmatpush.bf16.msra.mxu0 %v1105
        %1117 = vmatpush.bf16.msra.mxu0 %v1104
        %1118 = vmatpush.bf16.msra.mxu0 %v1103
        %1119 = vmatpush.bf16.msra.mxu0 %v1102
        %1120 = vmatpush.bf16.msra.mxu0 %v1101
        %1121 = vmatpush.bf16.msra.mxu0 %v1100
        %1122 = vmatpush.bf16.msra.mxu0 %v1099
        %1123 = vmatmul.bf16.gmra.mxu0 %v458
        %v1124 = vpop.f32.mrf.mxu0
        %v1125 = vadd.f32 0.0, %v1124
        %v1126 = vpop.f32.mrf.mxu0
        %v1127 = vadd.f32 0.0, %v1126
        %1128 = vmatmul.bf16.gmra.mxu0 %v459
        %v1129 = vpop.f32.mrf.mxu0
        %v1130 = vadd.f32 0.0, %v1129
        %v1131 = vpop.f32.mrf.mxu0
        %v1132 = vadd.f32 0.0, %v1131
        %1133 = vdwg.mxu0
        %1134 = vmatpush.bf16.xpose.msra.mxu0 %v1114
        %1135 = vmatpush.bf16.xpose.msra.mxu0 %v1113
        %1136 = vmatpush.bf16.xpose.msra.mxu0 %v1112
        %1137 = vmatpush.bf16.xpose.msra.mxu0 %v1111
        %1138 = vmatpush.bf16.xpose.msra.mxu0 %v1110
        %1139 = vmatpush.bf16.xpose.msra.mxu0 %v1109
        %1140 = vmatpush.bf16.xpose.msra.mxu0 %v1108
        %1141 = vmatpush.bf16.xpose.msra.mxu0 %v1107
        %1142 = vmatmul.bf16.gmra.mxu0 %v456
        %v1143 = vpop.f32.mrf.mxu0
        %v1144 = vadd.f32 0.0, %v1143
        %v1145 = vpop.f32.mrf.mxu0
        %v1146 = vadd.f32 0.0, %v1145
        %1147 = vmatmul.bf16.gmra.mxu0 %v457
        %v1148 = vpop.f32.mrf.mxu0
        %v1149 = vadd.f32 0.0, %v1148
        %v1150 = vpop.f32.mrf.mxu0
        %v1151 = vadd.f32 0.0, %v1150
        %1152 = vdwg.mxu0
        %v1153 = vpack.c.bf16 %v1146, %v1144
        %v1154 = vpack.c.bf16 %v1151, %v1149
        %1155 = vmatpush.bf16.msra.mxu0 %v1106
        %1156 = vmatpush.bf16.msra.mxu0 %v1105
        %1157 = vmatpush.bf16.msra.mxu0 %v1104
        %1158 = vmatpush.bf16.msra.mxu0 %v1103
        %1159 = vmatpush.bf16.msra.mxu0 %v1102
        %1160 = vmatpush.bf16.msra.mxu0 %v1101
        %1161 = vmatpush.bf16.msra.mxu0 %v1100
        %1162 = vmatpush.bf16.msra.mxu0 %v1099
        %1163 = vmatmul.bf16.gmra.mxu0 %v1153
        %v1164 = vpop.f32.mrf.mxu0
        %v1165 = vadd.f32 0.0, %v1164
        %v1166 = vpop.f32.mrf.mxu0
        %v1167 = vadd.f32 0.0, %v1166
        %1168 = vmatmul.bf16.gmra.mxu0 %v1154
        %v1169 = vpop.f32.mrf.mxu0
        %v1170 = vadd.f32 0.0, %v1169
        %v1171 = vpop.f32.mrf.mxu0
        %v1172 = vadd.f32 0.0, %v1171
        %1173 = vdwg.mxu0
        %1174 = vst [vmem:[%s383] sm:$0xff] %v408
        %1175 = vst [vmem:[%s383 + $0x8] sm:$0xff] %v409
        %1176 = vst [vmem:[%s383 + $0x10] sm:$0xff] %v410
        %1177 = vst [vmem:[%s383 + $0x18] sm:$0xff] %v411
        %1178 = vst [vmem:[%s383 + $0x20] sm:$0xff] %v1125
        %1179 = vst [vmem:[%s383 + $0x28] sm:$0xff] %v1127
        %1180 = vst [vmem:[%s383 + $0x30] sm:$0xff] %v1130
        %1181 = vst [vmem:[%s383 + $0x38] sm:$0xff] %v1132
        %v1182 = vmul.f32 %v408, %v1125
        %v1183 = vmul.f32 %v409, %v1127
        %v1184 = vmul.f32 %v410, %v1130
        %v1185 = vmul.f32 %v411, %v1132
        %1186 = vst [vmem:[%s383 + $0x40] sm:$0xff] %v1182
        %1187 = vst [vmem:[%s383 + $0x48] sm:$0xff] %v1183
        %1188 = vst [vmem:[%s383 + $0x50] sm:$0xff] %v1184
        %1189 = vst [vmem:[%s383 + $0x58] sm:$0xff] %v1185
        %v1190 = vmul.f32 %v408, %v1165
        %v1191 = vmul.f32 %v409, %v1167
        %v1192 = vmul.f32 %v410, %v1170
        %v1193 = vmul.f32 %v411, %v1172
        %1194 = vst [vmem:[%s383 + $0x60] sm:$0xff] %v1190
        %1195 = vst [vmem:[%s383 + $0x68] sm:$0xff] %v1191
        %1196 = vst [vmem:[%s383 + $0x70] sm:$0xff] %v1192
        %1197 = vst [vmem:[%s383 + $0x78] sm:$0xff] %v1193
        %s1198 = sand.u32 %s247, 1
        %s1199 = scalar_lea.sflag [#allocation4], %s1198
        %s1200 = sand.u32 %s247, 1
        %s1201 = smul.addr %s1200, 128
        %s1202 = scalar_lea.vmem [#allocation3], %s1201
        // Predicated region
        $region57: #{tpu_custom_call.1} parent=55 // pred_check
          %p1203 = pneg %p257
        $region58: #{tpu_custom_call.1} parent=55 // pred_check_branch
          %1205 = sbr.rel (%p1203) target = $region60
        $region59: #{tpu_custom_call.1} parent=55 // pred_region
          %1207 = vsyncadd %s1199, 0
          %s1208 = smul.addr %s25, 16
          %s1209 = smul.addr %s1208, 8
          %s1210 = scalar_lea.hbm %s9, %s1209
          %s1211 = sshll.u32 %s1202, 4
          %s1212 = int_to_ptr.vmem [resolvable:$true] %s1211
          %s1213 = sshll.u32 %s1210, 4
          %s1214 = int_to_ptr.hbm [resolvable:$true] %s1213
          %1219 = dma.vmem_to_hbm [thread:$0]  %s1212, 2048, %s1214, %s1199, 128, 128, 8
        $region60: #{tpu_custom_call.1} parent=55 // pred_fallthru
          _
      $region56: #{tpu_custom_call.1} parent=5 // pred_fallthru
        _
      %p1220 = scmp.le.s32.totalorder 2, %s20
      // Predicated region
      $region61: #{tpu_custom_call.1} parent=5 // pred_check
        %p1221 = pneg %p1220
      $region62: #{tpu_custom_call.1} parent=5 // pred_check_branch
        %1223 = sbr.rel (%p1221) target = $region64
      $region63: #{tpu_custom_call.1} parent=5 // pred_region
        %s1224 = ssub.s32 %s20, 2
        // Predicated region
        $region65: #{tpu_custom_call.1} parent=63 // pred_check
          %p1225 = pneg %p263
        $region66: #{tpu_custom_call.1} parent=63 // pred_check_branch
          %1227 = sbr.rel (%p1225) target = $region68
        $region67: #{tpu_custom_call.1} parent=63 // pred_region
          %s1228 = sand.u32 %s248, 1
          %s1229 = scalar_lea.sflag [#allocation4], %s1228
          %s1230 = sand.u32 %s248, 1
          %s1231 = smul.addr %s1230, 128
          %s1232 = scalar_lea.vmem [#allocation3], %s1231
          %1234 = dma.done %s1229, 2048
        $region68: #{tpu_custom_call.1} parent=63 // pred_fallthru
          _
      $region64: #{tpu_custom_call.1} parent=5 // pred_fallthru
        _
    $region6: #{tpu_custom_call.1} parent=1 // loop_footer
      %s24 = sadd.s32 1, %s20
    $region7: #{tpu_custom_call.1} parent=1 // loop_footer_branch
      %19 = sbr.rel target = $region3
    $region8: #{tpu_custom_call.1} parent=1 // loop_exit
      _
    %1235 = vsyncpa [#allocation4], 1
    %s1236 = scalar_lea.sflag [#allocation4], 1
    %1237 = vsyncpa %s1236, 1

</llo_original>
